<compile_context>
chip_gen: v5e
topology: v5e:2x2
jax: 0.10.0
libtpu: 0.0.40
codegen_flags: <defaults>
</compile_context>

<pallas_src>
import functools

import jax
import jax.numpy as jnp
from jax import lax
from jax.experimental import pallas as pl
from jax.experimental.pallas import tpu as pltpu


# --------------------------------------------------------------------------
# Small helpers: generation-aware VMEM sizing / tiling
# --------------------------------------------------------------------------
def _round_up(x, m):
    return ((x + m - 1) // m) * m


def _tpu_vmem_capacity_bytes():
    try:
        return int(pltpu.get_tpu_info().vmem_capacity_bytes)
    except Exception:
        return 128 * 1024 * 1024          # conservative default (v5e/v6e)


def _vmem_limit(est_bytes, cap_bytes):
    return int(min(max(2 * est_bytes, 32 * 1024 * 1024), int(0.75 * cap_bytes)))


def _pick_hw_tile(HW, cap_bytes):
    max_tile = 1024 if cap_bytes <= 64 * 1024 * 1024 else 2048   # v7x: 64 MiB VMEM
    for cand in (2048, 1024, 512, 256, 128):
        if cand <= max_tile and HW >= cand and HW % cand == 0:
            return cand
    return HW


# --------------------------------------------------------------------------
# Kernel 1: offset2joint_weight (masked softmax + weighted coordinate regression)
#           Memory-bound: big inputs streamed as bf16, upcast in VMEM.
# --------------------------------------------------------------------------
def _offset2joint_kernel(off_ref, hm_ref, w_ref, depth_ref, coords_ref, out_ref,
                         *, kernel_size):
    hm = hm_ref[0].astype(jnp.float32)     # [J, HW]
    w = w_ref[0].astype(jnp.float32)       # [J, HW]
    depth = depth_ref[0]                   # [1, HW]  (f32: drives the masks)
    coords = coords_ref[...]               # [2, HW]  row0 = mesh_y, row1 = mesh_x

    valid = (depth < 0.99).astype(jnp.float32)                  # torch .lt(0.99)
    w_masked = jnp.where(depth > 0.99, jnp.float32(-1e8), w)    # torch masked_fill(.gt)
    w_masked = w_masked - jnp.max(w_masked, axis=-1, keepdims=True)
    e = jnp.exp(w_masked)
    nw = e / jnp.sum(e, axis=-1, keepdims=True)                 # [J, HW] softmax over pixels

    dist = kernel_size - (hm * valid) * kernel_size             # [J, HW]
    nw_dist = nw * dist

    cols = []
    for c in range(3):
        off_c = off_ref[0, c].astype(jnp.float32)               # [J, HW]
        coord_c = depth if c == 2 else coords[c:c + 1]          # [1, HW]
        val = (off_c * valid) * nw_dist + coord_c * nw
        cols.append(jnp.sum(val, axis=-1, keepdims=True))       # [J, 1]
    out_ref[0] = jnp.concatenate(cols, axis=-1)                 # [J, 3]


def offset2joint_weight(img_offset, img_depth, kernel_size):
    """img_offset: [B, 5J, H, W] (NCHW), img_depth: [B, 1, h, w] -> joints [B, J, 3]."""
    B, c5j, H, W = img_offset.shape
    J = c5j // 5
    HW = H * W
    if img_depth.shape[-2:] != (H, W):
        img_depth = jax.image.resize(img_depth, (B, img_depth.shape[1], H, W),
                                     method="nearest")

    # Dense layouts: [B, 3, J, HW] offsets (no sublane-3 padding), [B, J, HW] maps.
    # Large tensors stream as bf16 (kernel is HBM-bound); depth stays f32.
    off_cjh = jnp.transpose(img_offset[:, :3 * J].reshape(B, J, 3, HW),
                            (0, 2, 1, 3)).astype(jnp.bfloat16)
    heatmap = img_offset[:, 3 * J:4 * J].reshape(B, J, HW).astype(jnp.bfloat16)
    weight = img_offset[:, 4 * J:].reshape(B, J, HW).astype(jnp.bfloat16)
    depth = img_depth.reshape(B, 1, HW)

    # Coordinate mesh (non-square safe): mesh_x varies over rows (H), mesh_y over columns (W).
    rx = 2.0 * (jnp.arange(H, dtype=jnp.float32) + 0.5) / H - 1.0
    ry = 2.0 * (jnp.arange(W, dtype=jnp.float32) + 0.5) / W - 1.0
    mesh_x = jnp.broadcast_to(rx[:, None], (H, W))
    mesh_y = jnp.broadcast_to(ry[None, :], (H, W))
    coords = jnp.stack([mesh_y, mesh_x], axis=0).reshape(2, HW)

    cap = _tpu_vmem_capacity_bytes()
    est = (2 * 5 * J * HW * 2           # bf16 inputs, double-buffered
           + 2 * 3 * HW * 4             # depth + coords
           + 6 * J * HW * 4)            # f32 upcasts / temporaries
    kfn = functools.partial(_offset2joint_kernel, kernel_size=float(kernel_size))
    return pl.pallas_call(
        kfn,
        out_shape=jax.ShapeDtypeStruct((B, J, 3), jnp.float32),
        grid=(B,),
        in_specs=[
            pl.BlockSpec((1, 3, J, HW), lambda b: (b, 0, 0, 0)),
            pl.BlockSpec((1, J, HW), lambda b: (b, 0, 0)),
            pl.BlockSpec((1, J, HW), lambda b: (b, 0, 0)),
            pl.BlockSpec((1, 1, HW), lambda b: (b, 0, 0)),
            pl.BlockSpec((2, HW), lambda b: (0, 0)),
        ],
        out_specs=pl.BlockSpec((1, J, 3), lambda b: (b, 0, 0)),
        compiler_params=pltpu.CompilerParams(
            dimension_semantics=("parallel",),
            vmem_limit_bytes=_vmem_limit(est, cap)),
    )(off_cjh, heatmap, weight, depth, coords)


# --------------------------------------------------------------------------
# Kernel 2: stage-invariant closeness-weighted gather (one-hot matmul on the MXU)
#           Runs ONCE per forward; result is reused by every stage's epilogue.
# --------------------------------------------------------------------------
def _gather_kernel(idx_ref, cl_ref, slab_ref, gath_ref, *, K, tile_hw):
    t = pl.program_id(1)

    @pl.when(t == 0)
    def _():
        gath_ref[...] = jnp.zeros_like(gath_ref)      # output block is the accumulator

    idx = idx_ref[0]                                  # [N, K] int32 (global HW indices)
    cl = cl_ref[0]                                    # [N, K] f32
    N = idx.shape[0]
    base = t * tile_hw
    hw_iota = lax.broadcasted_iota(jnp.int32, (N, tile_hw), 1) + base

    # Closeness folded into the one-hot with a single select per neighbour; the combined
    # scat is cast to bf16 once so the gather runs as ONE bf16 MXU matmul per HW tile.
    # TODO(synk): on v6e/v7x the scat build could run in packed bf16 VALU; kept f32 for v5e.
    scat = jnp.zeros((N, tile_hw), jnp.float32)
    for k in range(K):                                # K is small (4): static unroll
        scat = scat + jnp.where(idx[:, k:k + 1] == hw_iota, cl[:, k:k + 1], 0.0)
    gath_ref[0] += jnp.dot(scat.astype(jnp.bfloat16), slab_ref[0],
                           preferred_element_type=jnp.float32)


def gather_point_features(slab, pcl_index, pcl_closeness):
    """slab: [B, HW, 2C+J] bf16 (featD | featRGB | wmap) -> gath [B, N, 2C+J] f32."""
    B, HW, F = slab.shape
    _, N, K = pcl_index.shape
    cap = _tpu_vmem_capacity_bytes()
    tile_hw = _pick_hw_tile(HW, cap)
    nt = HW // tile_hw

    est = (2 * tile_hw * F * 2            # slab tile, double-buffered bf16
           + 3 * N * tile_hw * 4          # scat + select temporaries
           + 2 * N * F * 4                # resident/double-buffered output block
           + 4 * N * K * 4)               # idx / closeness
    kfn = functools.partial(_gather_kernel, K=K, tile_hw=tile_hw)
    # TODO(synk): if HW >> N*K in the deployed model, a scalar-prefetch DMA row-gather of the
    #             slab would cut the dominant HBM traffic further (only worth it batched).
    return pl.pallas_call(
        kfn,
        out_shape=jax.ShapeDtypeStruct((B, N, F), jnp.float32),
        grid=(B, nt),
        in_specs=[
            pl.BlockSpec((1, N, K), lambda b, t: (b, 0, 0)),         # pcl_index
            pl.BlockSpec((1, N, K), lambda b, t: (b, 0, 0)),         # pcl_closeness
            pl.BlockSpec((1, tile_hw, F), lambda b, t: (b, t, 0)),   # bf16 feature slab tile
        ],
        out_specs=pl.BlockSpec((1, N, F), lambda b, t: (b, 0, 0)),
        compiler_params=pltpu.CompilerParams(
            dimension_semantics=("parallel", "arbitrary"),
            vmem_limit_bytes=_vmem_limit(est, cap)),
    )(pcl_index, pcl_closeness, slab)


# --------------------------------------------------------------------------
# Kernel 3: per-stage epilogue — fused pcl_joint2offset + fused bf16 1x1-conv
#           embeddings + point->joint attention pooling + joint embedding.
# --------------------------------------------------------------------------
def _epilogue_kernel(gath_ref, pcl_ref, jointT_ref, joint_ref,
                     Wemb_ref, bemb_ref, Wrgb_ref, brgb_ref, Wj_ref, bj_ref,
                     pclfeat_out_ref, jfeat_out_ref,
                     act_buf, actj_buf,
                     *, C, J, Cp, seg, kernel_size):
    # Zero the padded activation buffers every iteration: padding lanes multiply zero weight
    # rows so they never contribute; unconditional zeroing is megacore-safe and ~free.
    act_buf[...] = jnp.zeros_like(act_buf)
    actj_buf[...] = jnp.zeros_like(actj_buf)

    gath = gath_ref[0]                                   # [N, 2C+J] f32 (hoisted gather)
    p = pcl_ref[0]                                       # [N, 3]
    jtT = jointT_ref[0]                                  # [3, J]

    # --- fused pcl_joint2offset (stays in VMEM, never round-trips HBM) ---
    off0 = jtT[0:1, :] - p[:, 0:1]                       # [N, J]
    off1 = jtT[1:2, :] - p[:, 1:2]
    off2 = jtT[2:3, :] - p[:, 2:3]
    dis = jnp.sqrt(off0 * off0 + off1 * off1 + off2 * off2)
    d = (kernel_size - dis) / kernel_size
    mask = (d >= 0).astype(jnp.float32) * (p[:, 2:3] < 0.99).astype(jnp.float32)
    d = d * mask
    scale = mask / (dis + 1e-8)

    # --- 128-lane-aligned activation packing (matching W rows are zero-padded) ---
    act_buf[:, 0:C] = gath[:, 0:C]                                   # gathered depth feature
    act_buf[:, Cp:Cp + 3] = p                                        # pcl xyz
    act_buf[:, Cp + seg:Cp + seg + J] = gath[:, 2 * C:2 * C + J]     # gathered weight map
    act_buf[:, Cp + 2 * seg:Cp + 2 * seg + J] = off0 * scale         # offset_norm (coord-major;
    act_buf[:, Cp + 3 * seg:Cp + 3 * seg + J] = off1 * scale         #  Wpose rows permuted)
    act_buf[:, Cp + 4 * seg:Cp + 4 * seg + J] = off2 * scale
    act_buf[:, Cp + 5 * seg:Cp + 5 * seg + J] = d

    bf = jnp.bfloat16
    # single fused bf16 [N, Demb_pad] @ [Demb_pad, C] embedding matmul (biases pre-summed)
    x = jnp.dot(act_buf[...].astype(bf), Wemb_ref[...],
                preferred_element_type=jnp.float32) + bemb_ref[...]
    x = jnp.maximum(x, 0.0)
    x = jnp.maximum(
        x + jnp.dot(gath[:, C:2 * C].astype(bf), Wrgb_ref[...],
                    preferred_element_type=jnp.float32) + brgb_ref[...],
        0.0)                                              # [N, C]
    pclfeat_out_ref[0] = x

    # --- attention over points: softmax along N, contraction over N on the MXU ---
    pcl_w = gath[:, 2 * C:2 * C + J]                      # [N, J]
    logits = pcl_w - jnp.max(pcl_w, axis=0, keepdims=True)
    e = jnp.exp(logits)
    att = e / jnp.sum(e, axis=0, keepdims=True)           # [N, J], columns sum to 1
    jf = lax.dot_general(att.astype(bf), x.astype(bf), (((0,), (0,)), ((), ())),
                         preferred_element_type=jnp.float32)   # [J, C], no explicit transpose

    # --- fused joint embedding bf16 [J, Dj_pad] @ [Dj_pad, C] ---
    actj_buf[:, 0:C] = jf
    actj_buf[:, Cp:Cp + 3] = joint_ref[0]
    jfe = jnp.dot(actj_buf[...].astype(bf), Wj_ref[...],
                  preferred_element_type=jnp.float32) + bj_ref[...]
    jfeat_out_ref[0] = jnp.maximum(jfe, 0.0)              # [J, C]


def block_epilogue(block_params, gath, pcl, joint_xyz, kernel_size, *, C):
    B, N, F = gath.shape
    J = joint_xyz.shape[1]
    assert F == 2 * C + J
    Cp, seg = block_params["Cp"], block_params["seg"]
    Demb_pad = block_params["W_emb"].shape[0]
    Dj_pad = block_params["W_j"].shape[0]
    jointT = jnp.transpose(joint_xyz, (0, 2, 1))          # [B, 3, J] (tiny)

    cap = _tpu_vmem_capacity_bytes()
    est = (2 * N * F * 4 + 2 * N * 3 * 4 + 4 * J * 3 * 4
           + (Demb_pad + Dj_pad + C) * C * 2 + 3 * C * 4
           + N * Demb_pad * 4 + J * Dj_pad * 4
           + 2 * N * C * 4 + 2 * J * C * 4)

    kfn = functools.partial(_epilogue_kernel, C=C, J=J, Cp=Cp, seg=seg,
                            kernel_size=float(kernel_size))
    return pl.pallas_call(
        kfn,
        out_shape=(jax.ShapeDtypeStruct((B, N, C), jnp.float32),
                   jax.ShapeDtypeStruct((B, J, C), jnp.float32)),
        grid=(B,),
        in_specs=[
            pl.BlockSpec((1, N, F), lambda b: (b, 0, 0)),          # hoisted gathered features
            pl.BlockSpec((1, N, 3), lambda b: (b, 0, 0)),          # pcl xyz
            pl.BlockSpec((1, 3, J), lambda b: (b, 0, 0)),          # joint xyz transposed
            pl.BlockSpec((1, J, 3), lambda b: (b, 0, 0)),          # joint xyz
            pl.BlockSpec((Demb_pad, C), lambda b: (0, 0)),         # W_emb (Wpf|Wxyz|Wpose) bf16
            pl.BlockSpec((1, C), lambda b: (0, 0)),                # b_emb
            pl.BlockSpec((C, C), lambda b: (0, 0)),                # Wrgb bf16
            pl.BlockSpec((1, C), lambda b: (0, 0)),                # brgb
            pl.BlockSpec((Dj_pad, C), lambda b: (0, 0)),           # W_j (Wjf|Wjx) bf16
            pl.BlockSpec((1, C), lambda b: (0, 0)),                # b_j
        ],
        out_specs=[
            pl.BlockSpec((1, N, C), lambda b: (b, 0, 0)),
            pl.BlockSpec((1, J, C), lambda b: (b, 0, 0)),
        ],
        scratch_shapes=[
            pltpu.VMEM((N, Demb_pad), jnp.float32),       # lane-aligned embedding activation
            pltpu.VMEM((J, Dj_pad), jnp.float32),         # lane-aligned joint activation
        ],
        compiler_params=pltpu.CompilerParams(
            dimension_semantics=("parallel",),
            vmem_limit_bytes=_vmem_limit(est, cap)),
    )(gath, pcl, jointT, joint_xyz,
      block_params["W_emb"], block_params["b_emb"],
      block_params["Wrgb"], block_params["brgb"],
      block_params["W_j"], block_params["b_j"])


# --------------------------------------------------------------------------
# Per-forward preprocessing (hoisted out of the stage loop)
# --------------------------------------------------------------------------
def prepare_feature_slab(img_feat, img_feat_rgb, img_offset, J):
    """NCHW maps -> channels-last bf16 slab [B, HW, 2C+J]; built ONCE per forward."""
    B, C, H, W = img_feat.shape
    HW = H * W
    featD = jnp.transpose(img_feat.reshape(B, C, HW), (0, 2, 1))
    featRGB = jnp.transpose(img_feat_rgb.reshape(B, C, HW), (0, 2, 1))
    wmap = jnp.transpose(img_offset[:, 4 * J:].reshape(B, J, HW), (0, 2, 1))
    return jnp.concatenate([featD, featRGB, wmap], axis=-1).astype(jnp.bfloat16)


def prepare_block_params(params, C, J):
    """Fuse, lane-align and bf16-quantize the 1x1-conv (eval-BN folded) weights, once/forward."""
    assert J <= 128
    Cp = _round_up(C, 128)
    seg = 128
    Demb_pad = Cp + 6 * seg       # segments: featD(C) | xyz(3) | w(J) | off_x | off_y | off_z | d
    Dj_pad = Cp + seg             # segments: joint_feat(C) | joint_xyz(3)

    Wpose = params["Wpose"]       # [5J, C]: rows = [w(J) | off j-major(3J) | dis(J)]
    Wemb = jnp.zeros((Demb_pad, C), jnp.float32)
    Wemb = Wemb.at[0:C].set(params["Wpf"])
    Wemb = Wemb.at[Cp:Cp + 3].set(params["Wxyz"])
    Wemb = Wemb.at[Cp + seg:Cp + seg + J].set(Wpose[0:J])
    for c in range(3):            # j-major offset rows -> coordinate-major aligned segments
        s = Cp + (2 + c) * seg
        Wemb = Wemb.at[s:s + J].set(Wpose[J + c:4 * J:3])
    Wemb = Wemb.at[Cp + 5 * seg:Cp + 5 * seg + J].set(Wpose[4 * J:5 * J])
    b_emb = params["bpf"] + params["bxyz"] + params["bpose"]

    Wj = jnp.zeros((Dj_pad, C), jnp.float32)
    Wj = Wj.at[0:C].set(params["Wjf"])
    Wj = Wj.at[Cp:Cp + 3].set(params["Wjx"])
    b_j = params["bjf"] + params["bjx"]

    return dict(W_emb=Wemb.astype(jnp.bfloat16), b_emb=b_emb,
                Wrgb=params["Wrgb"].astype(jnp.bfloat16), brgb=params["brgb"],
                W_j=Wj.astype(jnp.bfloat16), b_j=b_j, Cp=Cp, seg=seg)


# --------------------------------------------------------------------------
# Parameter init (deterministic, synthetic) + KPFusion-style forward
# --------------------------------------------------------------------------
def init_params(key, C, J):
    std = 0.001                                         # matches _init_weights Linear init
    bn_scale = 1.0 / jnp.sqrt(jnp.float32(1.0 + 1e-5))  # eval-mode BN (g=1,b=0,m=0,v=1) folded
    names_shapes = [("Wpf", (C, C)), ("Wxyz", (3, C)), ("Wpose", (5 * J, C)),
                    ("Wrgb", (C, C)), ("Wjf", (C, C)), ("Wjx", (3, C))]
    keys = jax.random.split(key, len(names_shapes))
    params = {}
    for (name, shape), k in zip(names_shapes, keys):
        # stored pre-transposed as [in, out]; BN folded
        params[name] = jax.random.normal(k, shape, jnp.float32) * std * bn_scale
        params["b" + name[1:]] = jnp.zeros((1, C), jnp.float32)
    return params


def kpfusion_forward(params, img_feat_rgb, img_feat, img_offset, img_depth,
                     pcl, pcl_closeness, pcl_index, kernel=0.8, num_stages=2):
    # TODO(synk): backbone_d / backbone_rgb (ResNet / ConvNeXt U-Nets) are external modules;
    #             their outputs (img_feat, img_feat_rgb, img_offset) are taken as inputs.
    joint_uvd = offset2joint_weight(img_offset, img_depth, kernel)          # [B, J, 3]

    # TODO(synk): loader.uvd_nl2xyznl_tensor / loader.img2pcl_index are dataset/camera host
    #             utilities; joint_xyz is approximated by joint_uvd and pcl_closeness /
    #             pcl_index are supplied as inputs.
    joint_xyz = joint_uvd

    B, C, H, W = img_feat.shape
    J = joint_xyz.shape[1]

    # Hoisted out of the stage loop: channels-last bf16 feature slab, fused bf16 weights,
    # and the stage-invariant closeness-weighted gather (computed ONCE, reused per stage).
    slab = prepare_feature_slab(img_feat, img_feat_rgb, img_offset, J)
    block_params = prepare_block_params(params, C, J)
    gath = gather_point_features(slab, pcl_index, pcl_closeness)            # [B, N, 2C+J]

    result = [img_offset]
    for _ in range(num_stages):
        pcl_feat, joint_feat = block_epilogue(block_params, gath, pcl, joint_xyz,
                                              kernel, C=C)
        # TODO(synk): DESA (pointnet2 QueryAndGroup ball-query), BERT TR encoders
        #             (init_TR / final_TR), GFM.joint2heatmap and the crossTR decoder have no
        #             in-repo definitions, so per-stage joint refinement is not applied.
        result.append(joint_feat)
        result.append(pcl_feat)
    return result


# --------------------------------------------------------------------------
if __name__ == "__main__":
    key = jax.random.PRNGKey(0)
    B, J, C, H, W, N, K = 2, 4, 32, 16, 16, 64, 4
    HW = H * W
    k1, k2, k3, k4, k5, k6, k7, k8 = jax.random.split(key, 8)

    img_feat = jax.random.normal(k1, (B, C, H, W), jnp.float32)        # backbone_d feature
    img_feat_rgb = jax.random.normal(k2, (B, C, H, W), jnp.float32)    # backbone_rgb feature
    img_offset = jax.random.normal(k3, (B, 5 * J, H, W), jnp.float32)  # offset/heatmap/weight
    img_depth = jax.random.uniform(k4, (B, 1, H, W), jnp.float32, -1.0, 1.0)
    pcl = jax.random.uniform(k5, (B, N, 3), jnp.float32, -1.0, 1.0)
    pcl_closeness = jax.nn.softmax(jax.random.normal(k6, (B, N, K), jnp.float32), axis=-1)
    pcl_index = jax.random.randint(k7, (B, N, K), 0, HW, dtype=jnp.int32)

    params = init_params(k8, C, J)

    outputs = kpfusion_forward(params, img_feat_rgb, img_feat, img_offset, img_depth,
                               pcl, pcl_closeness, pcl_index, kernel=0.8)
    jax.block_until_ready(outputs)
    print("KERNEL_OK")
</pallas_src>

<mosaic_0001>
module attributes {stable_mosaic.version = 11 : i64} {
  func.func @_offset2joint_kernel(%arg0: i32, %arg1: memref<1x3x4x256xbf16, #tpu.memory_space<vmem>>, %arg2: memref<1x4x256xbf16, #tpu.memory_space<vmem>>, %arg3: memref<1x4x256xbf16, #tpu.memory_space<vmem>>, %arg4: memref<1x1x256xf32, #tpu.memory_space<vmem>>, %arg5: memref<2x256xf32, #tpu.memory_space<vmem>>, %arg6: memref<1x4x3xf32, #tpu.memory_space<vmem>>) attributes {dimension_semantics = [#tpu.dimension_semantics<parallel>], iteration_bounds = array<i64: 2>, scalar_prefetch = 0 : i64, scratch_operands = 0 : i64, tpu.core_type = #tpu.core_type<tc>, window_params = [{transform_indices = @transform_0, window_bounds = array<i64: 1, 3, 4, 256>}, {transform_indices = @transform_1, window_bounds = array<i64: 1, 4, 256>}, {transform_indices = @transform_2, window_bounds = array<i64: 1, 4, 256>}, {transform_indices = @transform_3, window_bounds = array<i64: 1, 1, 256>}, {pipeline_mode = #tpu.pipeline_mode<synchronous>, transform_indices = @transform_4, window_bounds = array<i64: 2, 256>}, {transform_indices = @transform_5, window_bounds = array<i64: 1, 4, 3>}]} {
    %c0 = arith.constant 0 : index
    %c0_0 = arith.constant 0 : index
    %c0_1 = arith.constant 0 : index
    %0 = vector.load %arg2[%c0, %c0_0, %c0_1] : memref<1x4x256xbf16, #tpu.memory_space<vmem>>, vector<1x4x256xbf16>
    %1 = vector.shape_cast %0 : vector<1x4x256xbf16> to vector<4x256xbf16>
    %2 = arith.extf %1 : vector<4x256xbf16> to vector<4x256xf32>
    %c0_2 = arith.constant 0 : index
    %c0_3 = arith.constant 0 : index
    %c0_4 = arith.constant 0 : index
    %3 = vector.load %arg3[%c0_2, %c0_3, %c0_4] : memref<1x4x256xbf16, #tpu.memory_space<vmem>>, vector<1x4x256xbf16>
    %4 = vector.shape_cast %3 : vector<1x4x256xbf16> to vector<4x256xbf16>
    %5 = arith.extf %4 : vector<4x256xbf16> to vector<4x256xf32>
    %c0_5 = arith.constant 0 : index
    %c0_6 = arith.constant 0 : index
    %c0_7 = arith.constant 0 : index
    %6 = vector.load %arg4[%c0_5, %c0_6, %c0_7] : memref<1x1x256xf32, #tpu.memory_space<vmem>>, vector<1x1x256xf32>
    %7 = vector.shape_cast %6 : vector<1x1x256xf32> to vector<1x256xf32>
    %c0_8 = arith.constant 0 : index
    %c0_9 = arith.constant 0 : index
    %8 = vector.load %arg5[%c0_8, %c0_9] : memref<2x256xf32, #tpu.memory_space<vmem>>, vector<2x256xf32>
    %cst = arith.constant 9.900000e-01 : f32
    %9 = vector.broadcast %cst : f32 to vector<1x256xf32>
    %10 = arith.cmpf olt, %7, %9 : vector<1x256xf32>
    %11 = arith.extui %10 : vector<1x256xi1> to vector<1x256xi32>
    %12 = arith.sitofp %11 : vector<1x256xi32> to vector<1x256xf32>
    %cst_10 = arith.constant 9.900000e-01 : f32
    %13 = vector.broadcast %cst_10 : f32 to vector<1x256xf32>
    %14 = arith.cmpf ogt, %7, %13 : vector<1x256xf32>
    %cst_11 = arith.constant -1.000000e+08 : f32
    %15 = vector.shape_cast %14 : vector<1x256xi1> to vector<1x256xi1>
    %16 = vector.broadcast %15 : vector<1x256xi1> to vector<4x256xi1>
    %17 = vector.broadcast %cst_11 : f32 to vector<4x256xf32>
    %18 = arith.select %16, %17, %5 : vector<4x256xi1>, vector<4x256xf32>
    %cst_12 = arith.constant dense<0xFF800000> : vector<4xf32>
    %19 = vector.multi_reduction <maximumf>, %18, %cst_12 [1] : vector<4x256xf32> to vector<4xf32>
    %20 = vector.shape_cast %19 : vector<4xf32> to vector<4x1xf32>
    %21 = vector.broadcast %20 : vector<4x1xf32> to vector<4x256xf32>
    %22 = arith.subf %18, %21 : vector<4x256xf32>
    %23 = math.exp %22 : vector<4x256xf32>
    %cst_13 = arith.constant dense<0.000000e+00> : vector<4xf32>
    %24 = vector.multi_reduction <add>, %23, %cst_13 [1] : vector<4x256xf32> to vector<4xf32>
    %25 = vector.shape_cast %24 : vector<4xf32> to vector<4x1xf32>
    %26 = vector.broadcast %25 : vector<4x1xf32> to vector<4x256xf32>
    %27 = arith.divf %23, %26 : vector<4x256xf32>
    %28 = vector.broadcast %12 : vector<1x256xf32> to vector<4x256xf32>
    %29 = arith.mulf %2, %28 : vector<4x256xf32>
    %cst_14 = arith.constant 8.000000e-01 : f32
    %30 = vector.broadcast %cst_14 : f32 to vector<4x256xf32>
    %31 = arith.mulf %29, %30 : vector<4x256xf32>
    %cst_15 = arith.constant 8.000000e-01 : f32
    %32 = vector.broadcast %cst_15 : f32 to vector<4x256xf32>
    %33 = arith.subf %32, %31 : vector<4x256xf32>
    %34 = arith.mulf %27, %33 : vector<4x256xf32>
    %c0_16 = arith.constant 0 : index
    %c0_17 = arith.constant 0 : index
    %c0_18 = arith.constant 0 : index
    %c0_19 = arith.constant 0 : index
    %35 = vector.load %arg1[%c0_16, %c0_17, %c0_18, %c0_19] : memref<1x3x4x256xbf16, #tpu.memory_space<vmem>>, vector<1x1x4x256xbf16>
    %36 = vector.shape_cast %35 : vector<1x1x4x256xbf16> to vector<4x256xbf16>
    %37 = arith.extf %36 : vector<4x256xbf16> to vector<4x256xf32>
    %38 = vector.extract_strided_slice %8 {offsets = [0, 0], sizes = [1, 256], strides = [1, 1]} : vector<2x256xf32> to vector<1x256xf32>
    %39 = vector.broadcast %12 : vector<1x256xf32> to vector<4x256xf32>
    %40 = arith.mulf %37, %39 : vector<4x256xf32>
    %41 = arith.mulf %40, %34 : vector<4x256xf32>
    %42 = vector.broadcast %38 : vector<1x256xf32> to vector<4x256xf32>
    %43 = arith.mulf %42, %27 : vector<4x256xf32>
    %44 = arith.addf %41, %43 : vector<4x256xf32>
    %cst_20 = arith.constant dense<0.000000e+00> : vector<4xf32>
    %45 = vector.multi_reduction <add>, %44, %cst_20 [1] : vector<4x256xf32> to vector<4xf32>
    %46 = vector.shape_cast %45 : vector<4xf32> to vector<4x1xf32>
    %c0_21 = arith.constant 0 : index
    %c1 = arith.constant 1 : index
    %c0_22 = arith.constant 0 : index
    %c0_23 = arith.constant 0 : index
    %47 = vector.load %arg1[%c0_21, %c1, %c0_22, %c0_23] : memref<1x3x4x256xbf16, #tpu.memory_space<vmem>>, vector<1x1x4x256xbf16>
    %48 = vector.shape_cast %47 : vector<1x1x4x256xbf16> to vector<4x256xbf16>
    %49 = arith.extf %48 : vector<4x256xbf16> to vector<4x256xf32>
    %50 = vector.extract_strided_slice %8 {offsets = [1, 0], sizes = [1, 256], strides = [1, 1]} : vector<2x256xf32> to vector<1x256xf32>
    %51 = vector.broadcast %12 : vector<1x256xf32> to vector<4x256xf32>
    %52 = arith.mulf %49, %51 : vector<4x256xf32>
    %53 = arith.mulf %52, %34 : vector<4x256xf32>
    %54 = vector.broadcast %50 : vector<1x256xf32> to vector<4x256xf32>
    %55 = arith.mulf %54, %27 : vector<4x256xf32>
    %56 = arith.addf %53, %55 : vector<4x256xf32>
    %cst_24 = arith.constant dense<0.000000e+00> : vector<4xf32>
    %57 = vector.multi_reduction <add>, %56, %cst_24 [1] : vector<4x256xf32> to vector<4xf32>
    %58 = vector.shape_cast %57 : vector<4xf32> to vector<4x1xf32>
    %c0_25 = arith.constant 0 : index
    %c2 = arith.constant 2 : index
    %c0_26 = arith.constant 0 : index
    %c0_27 = arith.constant 0 : index
    %59 = vector.load %arg1[%c0_25, %c2, %c0_26, %c0_27] : memref<1x3x4x256xbf16, #tpu.memory_space<vmem>>, vector<1x1x4x256xbf16>
    %60 = vector.shape_cast %59 : vector<1x1x4x256xbf16> to vector<4x256xbf16>
    %61 = arith.extf %60 : vector<4x256xbf16> to vector<4x256xf32>
    %62 = vector.broadcast %12 : vector<1x256xf32> to vector<4x256xf32>
    %63 = arith.mulf %61, %62 : vector<4x256xf32>
    %64 = arith.mulf %63, %34 : vector<4x256xf32>
    %65 = vector.broadcast %7 : vector<1x256xf32> to vector<4x256xf32>
    %66 = arith.mulf %65, %27 : vector<4x256xf32>
    %67 = arith.addf %64, %66 : vector<4x256xf32>
    %cst_28 = arith.constant dense<0.000000e+00> : vector<4xf32>
    %68 = vector.multi_reduction <add>, %67, %cst_28 [1] : vector<4x256xf32> to vector<4xf32>
    %69 = vector.shape_cast %68 : vector<4xf32> to vector<4x1xf32>
    %70 = tpu.concatenate %46, %58, %69 in 1 : vector<4x1xf32>, vector<4x1xf32>, vector<4x1xf32> -> vector<4x3xf32>
    %c0_29 = arith.constant 0 : index
    %c0_30 = arith.constant 0 : index
    %c0_31 = arith.constant 0 : index
    %71 = vector.load %arg6[%c0_29, %c0_30, %c0_31] : memref<1x4x3xf32, #tpu.memory_space<vmem>>, vector<1x4x3xf32>
    %72 = vector.shape_cast %71 : vector<1x4x3xf32> to vector<4x3xf32>
    %73 = vector.shape_cast %70 : vector<4x3xf32> to vector<1x4x3xf32>
    tpu.vector_store %arg6[%c0_29, %c0_30, %c0_31], %73 {strides = array<i32>} : memref<1x4x3xf32, #tpu.memory_space<vmem>>, vector<1x4x3xf32>,
    return
  }
  func.func @transform_0(%arg0: i32) -> (i32, i32, i32, i32) {
    %c0_i32 = arith.constant 0 : i32
    %c0_i32_0 = arith.constant 0 : i32
    %c0_i32_1 = arith.constant 0 : i32
    %c0_i32_2 = arith.constant 0 : i32
    return %arg0, %c0_i32, %c0_i32_0, %c0_i32_1 : i32, i32, i32, i32
  }
  func.func @transform_1(%arg0: i32) -> (i32, i32, i32) {
    %c0_i32 = arith.constant 0 : i32
    %c0_i32_0 = arith.constant 0 : i32
    %c0_i32_1 = arith.constant 0 : i32
    return %arg0, %c0_i32, %c0_i32_0 : i32, i32, i32
  }
  func.func @transform_2(%arg0: i32) -> (i32, i32, i32) {
    %c0_i32 = arith.constant 0 : i32
    %c0_i32_0 = arith.constant 0 : i32
    %c0_i32_1 = arith.constant 0 : i32
    return %arg0, %c0_i32, %c0_i32_0 : i32, i32, i32
  }
  func.func @transform_3(%arg0: i32) -> (i32, i32, i32) {
    %c0_i32 = arith.constant 0 : i32
    %c0_i32_0 = arith.constant 0 : i32
    %c0_i32_1 = arith.constant 0 : i32
    return %arg0, %c0_i32, %c0_i32_0 : i32, i32, i32
  }
  func.func @transform_4(%arg0: i32) -> (i32, i32) {
    %c0_i32 = arith.constant 0 : i32
    %c0_i32_0 = arith.constant 0 : i32
    %c0_i32_1 = arith.constant 0 : i32
    return %c0_i32, %c0_i32_0 : i32, i32
  }
  func.func @transform_5(%arg0: i32) -> (i32, i32, i32) {
    %c0_i32 = arith.constant 0 : i32
    %c0_i32_0 = arith.constant 0 : i32
    %c0_i32_1 = arith.constant 0 : i32
    return %arg0, %c0_i32, %c0_i32_0 : i32, i32, i32
  }
}

</mosaic_0001>

<llo_original>
// kernel: tpu_custom_call.1
$region0: #{tpu_custom_call.1}
  #allocation0 [shape = 'u32[]', space=smem, size = 0x4, offset = 0x4, fixed_abs, tag = 'smem constant byte address 0x4 - core index']
  #allocation1 [shape = 'u32[72,128]{1,0:T(1,128)}', space=vmem, size = 0x9000, scoped, tag = 'internal scratch']
  %s0 = inlined_call_operand.hbm [shape: bf16[2,3,4,256], index: 0, kind: input, shape index: {}]
  %s1 = inlined_call_operand.hbm [shape: bf16[2,4,256], index: 1, kind: input, shape index: {}]
  %s2 = inlined_call_operand.hbm [shape: bf16[2,4,256], index: 2, kind: input, shape index: {}]
  %s3 = inlined_call_operand.hbm [shape: f32[2,1,256], index: 3, kind: input, shape index: {}]
  %s4 = inlined_call_operand.hbm [shape: f32[2,256], index: 4, kind: input, shape index: {}]
  %s5 = inlined_call_operand.vmem [shape: f32[2,4,3], index: 5, kind: output, shape index: {}]
  %s6 = sld [smem:[#allocation0]]
  $region73: #{tpu_custom_call.1} parent=0
    _
  %s8 = ssub.s32 1, %s6
  %s9 = scalar_select 0, %s8, %s6
  $region1: #{tpu_custom_call.1} parent=0
    #allocation2 [shape = 'u8[12288]{0}', space=vmem, size = 0x3000, scoped, tag = 'input window, operand 0']
    #allocation3 [shape = 's32[2]{0}', space=sflag, size = 0x8, scoped, tag = 'scoped memory for tpu_custom_call.1']
    #allocation4 [shape = 'u8[4096]{0}', space=vmem, size = 0x1000, scoped, tag = 'input window, operand 1']
    #allocation5 [shape = 's32[2]{0}', space=sflag, size = 0x8, scoped, tag = 'scoped memory for tpu_custom_call.1']
    #allocation6 [shape = 'u8[4096]{0}', space=vmem, size = 0x1000, scoped, tag = 'input window, operand 2']
    #allocation7 [shape = 'u8[2048]{0}', space=vmem, size = 0x800, scoped, tag = 'input window, operand 3']
    #allocation8 [shape = 's32[2]{0}', space=sflag, size = 0x8, scoped, tag = 'scoped memory for tpu_custom_call.1']
    #allocation9 [shape = 'u8[2048]{0}', space=vmem, size = 0x800, scoped, tag = 'input window, operand 4, single buffered']
    %10 = vsyncpa [#allocation3], 0
    %s11 = scalar_lea.sflag [#allocation3], 1
    %12 = vsyncpa %s11, 0
    %13 = vsyncpa [#allocation5], 0
    %s14 = scalar_lea.sflag [#allocation5], 1
    %15 = vsyncpa %s14, 0
    %16 = vsyncpa [#allocation8], 0
    %s17 = scalar_lea.sflag [#allocation8], 1
    %18 = vsyncpa %s17, 0
    loop: start=0, step=1, limit=4
    $region2: #{tpu_custom_call.1} parent=1 // loop_pre_header
      _
    $region3: #{tpu_custom_call.1} parent=1 // loop_header
      %s20 = sphi 0, %s24
      %p21 = scmp.ge.s32.totalorder %s20, 4
      %s30 = sphi 0, %s32
      %s33 = sphi 0, %s30
      %s34 = sphi 0, %s33
      %s50 = sphi 0, %s34
      %s56 = sphi 0, %s58
      %s59 = sphi 0, %s56
      %s60 = sphi 0, %s59
      %s76 = sphi 0, %s60
      %s82 = sphi 0, %s84
      %s85 = sphi 0, %s82
      %s86 = sphi 0, %s85
      %s102 = sphi 0, %s86
      %s108 = sphi 0, %s110
      %s111 = sphi 0, %s108
      %s112 = sphi 0, %s111
      %s128 = sphi 0, %s112
      %s132 = sphi 0, %s132
      %s134 = sphi 0, %s132
      %s135 = sphi 0, %s134
      %s149 = sphi 0, %s135
      %s155 = sphi 0, %s157
      %s158 = sphi 0, %s155
      %s159 = sphi 0, %s158
      %s175 = sphi 0, %s159
    $region4: #{tpu_custom_call.1} parent=1 // loop_header_branch
      %23 = sbr.rel (%p21) target = $region8
    $region5: #{tpu_custom_call.1} parent=1 // loop_body
      %s25 = ssub.s32 %s20, 1
      %s26 = ssub.s32 %s20, 2
      %s27 = sadd.s32 %s20, 1
      %s28 = ssub.s32 %s20, %s27
      %p29 = scmp.eq.s32.totalorder %s28, 0
      %s31 = sadd.s32 %s30, 1
      %s32 = scalar_select %p29, %s30, %s31
      %p35 = pneg %p29
      %p36 = scmp.eq.s32.totalorder %s20, 1
      %p37 = por %p35, %p36
      %p38 = scmp.ne.s32.totalorder %s30, %s33
      %p39 = scmp.eq.s32.totalorder %s20, 0
      %p40 = por %p38, %p39
      %p41 = scmp.ne.s32.totalorder %s30, %s33
      %p42 = scmp.eq.s32.totalorder %s25, 1
      %p43 = por %p41, %p42
      %p44 = scmp.ne.s32.totalorder %s33, %s34
      %p45 = scmp.eq.s32.totalorder %s25, 0
      %p46 = por %p44, %p45
      %p47 = scmp.ne.s32.totalorder %s33, %s34
      %p48 = scmp.eq.s32.totalorder %s26, 1
      %p49 = por %p47, %p48
      %p51 = scmp.ne.s32.totalorder %s34, %s50
      %p52 = scmp.eq.s32.totalorder %s26, 0
      %p53 = por %p51, %p52
      %s54 = ssub.s32 %s20, %s27
      %p55 = scmp.eq.s32.totalorder %s54, 0
      %s57 = sadd.s32 %s56, 1
      %s58 = scalar_select %p55, %s56, %s57
      %p61 = pneg %p55
      %p62 = scmp.eq.s32.totalorder %s20, 1
      %p63 = por %p61, %p62
      %p64 = scmp.ne.s32.totalorder %s56, %s59
      %p65 = scmp.eq.s32.totalorder %s20, 0
      %p66 = por %p64, %p65
      %p67 = scmp.ne.s32.totalorder %s56, %s59
      %p68 = scmp.eq.s32.totalorder %s25, 1
      %p69 = por %p67, %p68
      %p70 = scmp.ne.s32.totalorder %s59, %s60
      %p71 = scmp.eq.s32.totalorder %s25, 0
      %p72 = por %p70, %p71
      %p73 = scmp.ne.s32.totalorder %s59, %s60
      %p74 = scmp.eq.s32.totalorder %s26, 1
      %p75 = por %p73, %p74
      %p77 = scmp.ne.s32.totalorder %s60, %s76
      %p78 = scmp.eq.s32.totalorder %s26, 0
      %p79 = por %p77, %p78
      %s80 = ssub.s32 %s20, %s27
      %p81 = scmp.eq.s32.totalorder %s80, 0
      %s83 = sadd.s32 %s82, 1
      %s84 = scalar_select %p81, %s82, %s83
      %p87 = pneg %p81
      %p88 = scmp.eq.s32.totalorder %s20, 1
      %p89 = por %p87, %p88
      %p90 = scmp.ne.s32.totalorder %s82, %s85
      %p91 = scmp.eq.s32.totalorder %s20, 0
      %p92 = por %p90, %p91
      %p93 = scmp.ne.s32.totalorder %s82, %s85
      %p94 = scmp.eq.s32.totalorder %s25, 1
      %p95 = por %p93, %p94
      %p96 = scmp.ne.s32.totalorder %s85, %s86
      %p97 = scmp.eq.s32.totalorder %s25, 0
      %p98 = por %p96, %p97
      %p99 = scmp.ne.s32.totalorder %s85, %s86
      %p100 = scmp.eq.s32.totalorder %s26, 1
      %p101 = por %p99, %p100
      %p103 = scmp.ne.s32.totalorder %s86, %s102
      %p104 = scmp.eq.s32.totalorder %s26, 0
      %p105 = por %p103, %p104
      %s106 = ssub.s32 %s20, %s27
      %p107 = scmp.eq.s32.totalorder %s106, 0
      %s109 = sadd.s32 %s108, 1
      %s110 = scalar_select %p107, %s108, %s109
      %p113 = pneg %p107
      %p114 = scmp.eq.s32.totalorder %s20, 1
      %p115 = por %p113, %p114
      %p116 = scmp.ne.s32.totalorder %s108, %s111
      %p117 = scmp.eq.s32.totalorder %s20, 0
      %p118 = por %p116, %p117
      %p119 = scmp.ne.s32.totalorder %s108, %s111
      %p120 = scmp.eq.s32.totalorder %s25, 1
      %p121 = por %p119, %p120
      %p122 = scmp.ne.s32.totalorder %s111, %s112
      %p123 = scmp.eq.s32.totalorder %s25, 0
      %p124 = por %p122, %p123
      %p125 = scmp.ne.s32.totalorder %s111, %s112
      %p126 = scmp.eq.s32.totalorder %s26, 1
      %p127 = por %p125, %p126
      %p129 = scmp.ne.s32.totalorder %s112, %s128
      %p130 = scmp.eq.s32.totalorder %s26, 0
      %p131 = por %p129, %p130
      %s133 = sadd.s32 %s132, 1
      %p136 = scmp.eq.s32.totalorder %s20, 1
      %p137 = scmp.ne.s32.totalorder %s132, %s134
      %p138 = scmp.eq.s32.totalorder %s20, 0
      %p139 = por %p137, %p138
      %p140 = scmp.ne.s32.totalorder %s132, %s134
      %p141 = scmp.eq.s32.totalorder %s25, 1
      %p142 = por %p140, %p141
      %p143 = scmp.ne.s32.totalorder %s134, %s135
      %p144 = scmp.eq.s32.totalorder %s25, 0
      %p145 = por %p143, %p144
      %p146 = scmp.ne.s32.totalorder %s134, %s135
      %p147 = scmp.eq.s32.totalorder %s26, 1
      %p148 = por %p146, %p147
      %p150 = scmp.ne.s32.totalorder %s135, %s149
      %p151 = scmp.eq.s32.totalorder %s26, 0
      %p152 = por %p150, %p151
      %s153 = ssub.s32 %s20, %s27
      %p154 = scmp.eq.s32.totalorder %s153, 0
      %s156 = sadd.s32 %s155, 1
      %s157 = scalar_select %p154, %s155, %s156
      %p160 = pneg %p154
      %p161 = scmp.eq.s32.totalorder %s20, 1
      %p162 = por %p160, %p161
      %p163 = scmp.ne.s32.totalorder %s155, %s158
      %p164 = scmp.eq.s32.totalorder %s20, 0
      %p165 = por %p163, %p164
      %p166 = scmp.ne.s32.totalorder %s155, %s158
      %p167 = scmp.eq.s32.totalorder %s25, 1
      %p168 = por %p166, %p167
      %p169 = scmp.ne.s32.totalorder %s158, %s159
      %p170 = scmp.eq.s32.totalorder %s25, 0
      %p171 = por %p169, %p170
      %p172 = scmp.ne.s32.totalorder %s158, %s159
      %p173 = scmp.eq.s32.totalorder %s26, 1
      %p174 = por %p172, %p173
      %p176 = scmp.ne.s32.totalorder %s159, %s175
      %p177 = scmp.eq.s32.totalorder %s26, 0
      %p178 = por %p176, %p177
      %p179 = scmp.le.s32.totalorder 1, %s20
      %p180 = scmp.lt.s32.totalorder %s20, 3
      %p181 = pnand %p179, %p180
      %p182 = pneg %p181
      // Predicated region
      $region9: #{tpu_custom_call.1} parent=5 // pred_check
        _
      $region10: #{tpu_custom_call.1} parent=5 // pred_check_branch
        %184 = sbr.rel (%p181) target = $region12
      $region11: #{tpu_custom_call.1} parent=5 // pred_region
        %s185 = ssub.s32 %s20, 1
        // Predicated region
        $region13: #{tpu_custom_call.1} parent=11 // pred_check
          %p186 = pneg %p145
        $region14: #{tpu_custom_call.1} parent=11 // pred_check_branch
          %188 = sbr.rel (%p186) target = $region16
        $region15: #{tpu_custom_call.1} parent=11 // pred_region
          %190 = vsyncadd [#allocation8], 0
          %s192 = sshll.u32 %s4, 4
          %s193 = int_to_ptr.hbm [resolvable:$true] %s192
          %s194 = sshll.u32 [#allocation9], 4
          %s195 = int_to_ptr.vmem [resolvable:$true] %s194
          %197 = dma.hbm_to_vmem [thread:$0]  %s193, 64, %s195, [#allocation8]
        $region16: #{tpu_custom_call.1} parent=11 // pred_fallthru
          _
      $region12: #{tpu_custom_call.1} parent=5 // pred_fallthru
        _
      %p198 = scmp.lt.s32.totalorder %s20, 2
      // Predicated region
      $region17: #{tpu_custom_call.1} parent=5 // pred_check
        %p199 = pneg %p198
      $region18: #{tpu_custom_call.1} parent=5 // pred_check_branch
        %201 = sbr.rel (%p199) target = $region20
      $region19: #{tpu_custom_call.1} parent=5 // pred_region
        // Predicated region
        $region21: #{tpu_custom_call.1} parent=19 // pred_check
          %p202 = pneg %p40
        $region22: #{tpu_custom_call.1} parent=19 // pred_check_branch
          %204 = sbr.rel (%p202) target = $region24
        $region23: #{tpu_custom_call.1} parent=19 // pred_region
          %s205 = sand.u32 %s30, 1
          %s206 = scalar_lea.sflag [#allocation3], %s205
          %s207 = sand.u32 %s30, 1
          %s208 = smul.addr %s207, 12
          %s209 = scalar_lea.vmem [#allocation2], %s208
          %211 = vsyncadd %s206, 0
          %s212 = smul.addr %s20, 6
          %s213 = smul.addr %s212, 2
          %s214 = scalar_lea.hbm %s0, %s213
          %s215 = sshll.u32 %s214, 4
          %s216 = int_to_ptr.hbm [resolvable:$true] %s215
          %s217 = sshll.u32 %s209, 4
          %s218 = int_to_ptr.vmem [resolvable:$true] %s217
          %223 = dma.hbm_to_vmem [thread:$0]  %s216, 192, %s218, %s206, 64, 64, 4
        $region24: #{tpu_custom_call.1} parent=19 // pred_fallthru
          _
        // Predicated region
        $region25: #{tpu_custom_call.1} parent=19 // pred_check
          %p224 = pneg %p66
        $region26: #{tpu_custom_call.1} parent=19 // pred_check_branch
          %226 = sbr.rel (%p224) target = $region28
        $region27: #{tpu_custom_call.1} parent=19 // pred_region
          %s227 = sand.u32 %s20, 1
          %s228 = scalar_lea.sflag [#allocation5], %s227
          %s229 = sand.u32 %s56, 1
          %s230 = smul.addr %s229, 4
          %s231 = scalar_lea.vmem [#allocation4], %s230
          %233 = vsyncadd %s228, 0
          %s234 = smul.addr %s20, 2
          %s235 = smul.addr %s234, 2
          %s236 = scalar_lea.hbm %s1, %s235
          %s238 = sshll.u32 %s236, 4
          %s239 = int_to_ptr.hbm [resolvable:$true] %s238
          %s240 = sshll.u32 %s231, 4
          %s241 = int_to_ptr.vmem [resolvable:$true] %s240
          %243 = dma.hbm_to_vmem [thread:$0]  %s239, 64, %s241, %s228
        $region28: #{tpu_custom_call.1} parent=19 // pred_fallthru
          _
        // Predicated region
        $region29: #{tpu_custom_call.1} parent=19 // pred_check
          %p244 = pneg %p92
        $region30: #{tpu_custom_call.1} parent=19 // pred_check_branch
          %246 = sbr.rel (%p244) target = $region32
        $region31: #{tpu_custom_call.1} parent=19 // pred_region
          %s247 = sand.u32 %s20, 1
          %s248 = scalar_lea.sflag [#allocation5], %s247
          %s249 = sand.u32 %s82, 1
          %s250 = smul.addr %s249, 4
          %s251 = scalar_lea.vmem [#allocation6], %s250
          %253 = vsyncadd %s248, 0
          %s254 = smul.addr %s20, 2
          %s255 = smul.addr %s254, 2
          %s256 = scalar_lea.hbm %s2, %s255
          %s258 = sshll.u32 %s256, 4
          %s259 = int_to_ptr.hbm [resolvable:$true] %s258
          %s260 = sshll.u32 %s251, 4
          %s261 = int_to_ptr.vmem [resolvable:$true] %s260
          %263 = dma.hbm_to_vmem [thread:$0]  %s259, 64, %s261, %s248
        $region32: #{tpu_custom_call.1} parent=19 // pred_fallthru
          _
        // Predicated region
        $region33: #{tpu_custom_call.1} parent=19 // pred_check
          %p264 = pneg %p118
        $region34: #{tpu_custom_call.1} parent=19 // pred_check_branch
          %266 = sbr.rel (%p264) target = $region36
        $region35: #{tpu_custom_call.1} parent=19 // pred_region
          %s267 = sand.u32 %s20, 1
          %s268 = scalar_lea.sflag [#allocation8], %s267
          %s269 = sand.u32 %s108, 1
          %s270 = smul.addr %s269, 2
          %s271 = scalar_lea.vmem [#allocation7], %s270
          %273 = vsyncadd %s268, 0
          %s274 = smul.addr %s20, 2
          %s275 = scalar_lea.hbm %s3, %s274
          %s277 = sshll.u32 %s275, 4
          %s278 = int_to_ptr.hbm [resolvable:$true] %s277
          %s279 = sshll.u32 %s271, 4
          %s280 = int_to_ptr.vmem [resolvable:$true] %s279
          %282 = dma.hbm_to_vmem [thread:$0]  %s278, 32, %s280, %s268
        $region36: #{tpu_custom_call.1} parent=19 // pred_fallthru
          _
      $region20: #{tpu_custom_call.1} parent=5 // pred_fallthru
        _
      %p283 = scmp.le.s32.totalorder 1, %s20
      %p284 = scmp.lt.s32.totalorder %s20, 3
      %p285 = pnand %p283, %p284
      %p286 = pneg %p285
      // Predicated region
      $region37: #{tpu_custom_call.1} parent=5 // pred_check
        _
      $region38: #{tpu_custom_call.1} parent=5 // pred_check_branch
        %288 = sbr.rel (%p285) target = $region40
      $region39: #{tpu_custom_call.1} parent=5 // pred_region
        %s289 = ssub.s32 %s20, 1
        %s290 = sand.u32 %s33, 1
        %s291 = scalar_lea.sflag [#allocation3], %s290
        %s292 = sand.u32 %s33, 1
        %s293 = smul.addr %s292, 12
        %s294 = scalar_lea.vmem [#allocation2], %s293
        // Predicated region
        $region41: #{tpu_custom_call.1} parent=39 // pred_check
          %p295 = pneg %p46
        $region42: #{tpu_custom_call.1} parent=39 // pred_check_branch
          %297 = sbr.rel (%p295) target = $region44
        $region43: #{tpu_custom_call.1} parent=39 // pred_region
          %299 = dma.done %s291, 192
        $region44: #{tpu_custom_call.1} parent=39 // pred_fallthru
          _
        %s300 = sand.u32 %s25, 1
        %s301 = scalar_lea.sflag [#allocation5], %s300
        %s302 = sand.u32 %s59, 1
        %s303 = smul.addr %s302, 4
        %s304 = scalar_lea.vmem [#allocation4], %s303
        // Predicated region
        $region45: #{tpu_custom_call.1} parent=39 // pred_check
          %p305 = pneg %p72
        $region46: #{tpu_custom_call.1} parent=39 // pred_check_branch
          %307 = sbr.rel (%p305) target = $region48
        $region47: #{tpu_custom_call.1} parent=39 // pred_region
          %309 = dma.done %s301, 64
        $region48: #{tpu_custom_call.1} parent=39 // pred_fallthru
          _
        %s310 = sand.u32 %s25, 1
        %s311 = scalar_lea.sflag [#allocation5], %s310
        %s312 = sand.u32 %s85, 1
        %s313 = smul.addr %s312, 4
        %s314 = scalar_lea.vmem [#allocation6], %s313
        // Predicated region
        $region49: #{tpu_custom_call.1} parent=39 // pred_check
          %p315 = pneg %p98
        $region50: #{tpu_custom_call.1} parent=39 // pred_check_branch
          %317 = sbr.rel (%p315) target = $region52
        $region51: #{tpu_custom_call.1} parent=39 // pred_region
          %319 = dma.done %s311, 64
        $region52: #{tpu_custom_call.1} parent=39 // pred_fallthru
          _
        %s320 = sand.u32 %s25, 1
        %s321 = scalar_lea.sflag [#allocation8], %s320
        %s322 = sand.u32 %s111, 1
        %s323 = smul.addr %s322, 2
        %s324 = scalar_lea.vmem [#allocation7], %s323
        // Predicated region
        $region53: #{tpu_custom_call.1} parent=39 // pred_check
          %p325 = pneg %p124
        $region54: #{tpu_custom_call.1} parent=39 // pred_check_branch
          %327 = sbr.rel (%p325) target = $region56
        $region55: #{tpu_custom_call.1} parent=39 // pred_region
          %329 = dma.done %s321, 32
        $region56: #{tpu_custom_call.1} parent=39 // pred_fallthru
          _
        // Predicated region
        $region57: #{tpu_custom_call.1} parent=39 // pred_check
          %p330 = pneg %p145
        $region58: #{tpu_custom_call.1} parent=39 // pred_check_branch
          %332 = sbr.rel (%p330) target = $region60
        $region59: #{tpu_custom_call.1} parent=39 // pred_region
          %334 = dma.done [#allocation8], 64
        $region60: #{tpu_custom_call.1} parent=39 // pred_fallthru
          _
        %s335 = sand.u32 %s33, 1
        %s336 = scalar_lea.sflag [#allocation3], %s335
        %s337 = sand.u32 %s33, 1
        %s338 = smul.addr %s337, 12
        %s339 = scalar_lea.vmem [#allocation2], %s338
        %p340 = pneg %p46
        %p341 = pneg %p43
        %s342 = sand.u32 %s25, 1
        %s343 = scalar_lea.sflag [#allocation5], %s342
        %s344 = sand.u32 %s59, 1
        %s345 = smul.addr %s344, 4
        %s346 = scalar_lea.vmem [#allocation4], %s345
        %p347 = pneg %p72
        %p348 = pneg %p69
        %s349 = sand.u32 %s25, 1
        %s350 = scalar_lea.sflag [#allocation5], %s349
        %s351 = sand.u32 %s85, 1
        %s352 = smul.addr %s351, 4
        %s353 = scalar_lea.vmem [#allocation6], %s352
        %p354 = pneg %p98
        %p355 = pneg %p95
        %s356 = sand.u32 %s25, 1
        %s357 = scalar_lea.sflag [#allocation8], %s356
        %s358 = sand.u32 %s111, 1
        %s359 = smul.addr %s358, 2
        %s360 = scalar_lea.vmem [#allocation7], %s359
        %p361 = pneg %p124
        %p362 = pneg %p121
        %p363 = pneg %p145
        %p364 = pneg %p142
        %p365 = pneg %p171
        %p366 = pneg %p168
        %p367 = scmp.lt.s32.totalorder %s25, 1
        %s368 = scalar_select %p367, %s25, 1
        %s369 = smul.addr %s368, 4
        %s370 = scalar_lea.vmem %s5, %s369
        %p371 = scmp.lt.s32.totalorder %s25, 1
        %s372 = scalar_select %p371, %s25, 1
        %s373 = smul.addr %s372, 4
        %s374 = scalar_lea.vmem %s5, %s373
        %v375 = vld [vmem:[%s304] sm:$0xf]
        %v376 = vunpack.c.l.bf16 %v375
        %v377 = vld [vmem:[%s314] sm:$0xf]
        %v378 = vunpack.c.l.bf16 %v377
        %v379 = vld [vmem:[%s324] sm:$0x3]
        %v380 = vld [vmem:[#allocation9] sm:$0xf]
        %vm381 = vcmp.lt.f32.partialorder %v379, 0.99
        %v382 = vsel %vm381, 1, 0
        %v383 = vcvt.s32.f32 %v382
        %vm384 = vcmp.gt.f32.partialorder %v379, 0.99
        %v385 = vsel %vm384, 1, 0
        %v386 = vperm.slane %v385, 0
        %v387 = vperm.slane %v385, 1
        %vm388 = vcmp.eq.s32.totalorder %v386, 1
        %vm389 = vcmp.eq.s32.totalorder %v387, 1
        %391 = vst [vmem:[#allocation1] ss:$2 sm:$0xff] %v378
        %v392 = vld.sshfl [vmem:[#allocation1] sm:$0xff pattern:$0x75316420]
        %v393 = vld.sshfl [vmem:[#allocation1 + $0x8] sm:$0xff pattern:$0x75316420]
        %v396 = vsel %vm388, -1e+08, %v392
        %v397 = vsel %vm389, -1e+08, %v393
        %vm398 = vcmask 1043456
        %v399 = vsel %vm398, %v396, -inf
        %v400 = vsel %vm398, %v397, -inf
        %v401 = vmax.f32 %v399, %v400
        %402 = vmax.xlane.f32.xlu0 %v401
        %v403 = vpop.xlane.xlu0 %402
        %v404 = vsub.f32 %v396, %v403
        %v405 = vsub.f32 %v397, %v403
        %v406 = vmul.f32 %v404, 1.442695
        %v407 = vpow.pop %v406
        %v408 = vmul.f32 %v405, 1.442695
        %v409 = vpow.pop %v408
        %v410 = vsel %vm398, %v407, 0.0
        %v411 = vsel %vm398, %v409, 0.0
        %v412 = vadd.f32 %v410, %v411
        %413 = vadd.xlane.f32.xlu0 %v412
        %v414 = vpop.xlane.xlu0 %413
        %v415 = vrcp.pop %v414
        %v416 = vmul.f32 %v414, %v415
        %v417 = vsub.f32 1.0, %v416
        %v418 = vmul.f32 %v415, %v417
        %v419 = vadd.f32 %v415, %v418
        %vm420 = vweird.f32 %v414
        %vm421 = vweird.f32 %v415
        %vm422 = vmor %vm420, %vm421
        %v423 = vsel %vm422, %v415, %v419
        %v424 = vand.u32 2147483647, %v414
        %vm425 = vcmp.eq.f32.partialorder %v424, 8.507059e+37
        %v426 = vand.u32 %v414, 2147483648
        %v427 = vor.u32 1.1754944e-38, %v426
        %v428 = vsel %vm425, %v427, %v423
        %v429 = vmul.f32 %v407, %v428
        %v430 = vmul.f32 %v409, %v428
        %v432 = vperm.slane %v383, 0
        %v433 = vperm.slane %v383, 1
        %v434 = vrot.slane %v433, 4
        %v435 = vsel %vm398, %v432, %v434
        %v437 = vmul.f32 %v376, %v435
        %v438 = vmul.f32 %v437, 0.8
        %v439 = vsub.f32 0.8, %v438
        %441 = vst [vmem:[#allocation1] ss:$2 sm:$0xff] %v439
        %v442 = vld.sshfl [vmem:[#allocation1] sm:$0xff pattern:$0x75316420]
        %v443 = vld.sshfl [vmem:[#allocation1 + $0x8] sm:$0xff pattern:$0x75316420]
        %v446 = vmul.f32 %v429, %v442
        %v447 = vmul.f32 %v430, %v443
        %v448 = vld [vmem:[%s294] sm:$0xf]
        %v449 = vunpack.c.l.bf16 %v448
        %v450 = vmul.f32 %v449, %v435
        %v453 = vrot.slane %v447, 4
        %v454 = vsel %vm398, %v446, %v453
        %v456 = vmul.f32 %v450, %v454
        %v458 = vperm.slane %v380, 0
        %v459 = vperm.slane %v380, 2
        %v462 = vperm.slane %v458, 0
        %v463 = vperm.slane %v459, 0
        %v464 = vmul.f32 %v462, %v429
        %v465 = vmul.f32 %v463, %v430
        %v468 = vrot.slane %v465, 4
        %v469 = vsel %vm398, %v464, %v468
        %v471 = vadd.f32 %v456, %v469
        %473 = vst [vmem:[#allocation1] ss:$2 sm:$0xff] %v471
        %v474 = vld.sshfl [vmem:[#allocation1] sm:$0xff pattern:$0x75316420]
        %v475 = vld.sshfl [vmem:[#allocation1 + $0x8] sm:$0xff pattern:$0x75316420]
        %v478 = vsel %vm398, %v474, 0.0
        %v479 = vsel %vm398, %v475, 0.0
        %v480 = vadd.f32 %v478, %v479
        %481 = vadd.xlane.f32.xlu0 %v480
        %v482 = vpop.xlane.xlu0 %481
        %s483 = scalar_lea.vmem %s294, 4 [#allocation2]
        %v484 = vld [vmem:[%s483] sm:$0xf]
        %v485 = vunpack.c.l.bf16 %v484
        %v486 = vmul.f32 %v485, %v435
        %v487 = vmul.f32 %v486, %v454
        %v488 = vperm.slane %v380, 1
        %v489 = vperm.slane %v380, 3
        %v492 = vperm.slane %v488, 1
        %v493 = vperm.slane %v489, 1
        %v494 = vmul.f32 %v492, %v429
        %v495 = vmul.f32 %v493, %v430
        %v498 = vrot.slane %v495, 4
        %v499 = vsel %vm398, %v494, %v498
        %v501 = vadd.f32 %v487, %v499
        %503 = vst [vmem:[#allocation1] ss:$2 sm:$0xff] %v501
        %v504 = vld.sshfl [vmem:[#allocation1] sm:$0xff pattern:$0x75316420]
        %v505 = vld.sshfl [vmem:[#allocation1 + $0x8] sm:$0xff pattern:$0x75316420]
        %v508 = vsel %vm398, %v504, 0.0
        %v509 = vsel %vm398, %v505, 0.0
        %v510 = vadd.f32 %v508, %v509
        %511 = vadd.xlane.f32.xlu0 %v510
        %v512 = vpop.xlane.xlu0 %511
        %s513 = scalar_lea.vmem %s294, 8 [#allocation2]
        %v514 = vld [vmem:[%s513] sm:$0xf]
        %v515 = vunpack.c.l.bf16 %v514
        %v516 = vmul.f32 %v515, %v435
        %v517 = vmul.f32 %v516, %v454
        %v519 = vperm.slane %v379, 0
        %v520 = vperm.slane %v379, 1
        %v523 = vmul.f32 %v519, %v429
        %v524 = vmul.f32 %v520, %v430
        %v527 = vrot.slane %v524, 4
        %v528 = vsel %vm398, %v523, %v527
        %v530 = vadd.f32 %v517, %v528
        %532 = vst [vmem:[#allocation1] ss:$2 sm:$0xff] %v530
        %v533 = vld.sshfl [vmem:[#allocation1] sm:$0xff pattern:$0x75316420]
        %v534 = vld.sshfl [vmem:[#allocation1 + $0x8] sm:$0xff pattern:$0x75316420]
        %v537 = vsel %vm398, %v533, 0.0
        %v538 = vsel %vm398, %v534, 0.0
        %v539 = vadd.f32 %v537, %v538
        %540 = vadd.xlane.f32.xlu0 %v539
        %v541 = vpop.xlane.xlu0 %540
        %vm542 = vcmask 7168
        %v543 = vsel %vm542, %v482, %v512
        %vm544 = vcmask 15360
        %v545 = vsel %vm544, %v543, %v541
        %vm546 = vcmask 19456
        %547 = vst.msk [vmem:[%s374] sm:$0xf] %vm546, %v545
        %p548 = scmp.lt.s32.totalorder %s25, 1
        %s549 = scalar_select %p548, %s25, 1
        %s550 = smul.addr %s549, 4
        %s551 = scalar_lea.vmem %s5, %s550
        // Predicated region
        $region61: #{tpu_custom_call.1} parent=39 // pred_check
          %p552 = pneg %p168
        $region62: #{tpu_custom_call.1} parent=39 // pred_check_branch
          %554 = sbr.rel (%p552) target = $region64
        $region63: #{tpu_custom_call.1} parent=39 // pred_region
          _
        $region64: #{tpu_custom_call.1} parent=39 // pred_fallthru
          _
      $region40: #{tpu_custom_call.1} parent=5 // pred_fallthru
        _
      %p555 = scmp.le.s32.totalorder 2, %s20
      // Predicated region
      $region65: #{tpu_custom_call.1} parent=5 // pred_check
        %p556 = pneg %p555
      $region66: #{tpu_custom_call.1} parent=5 // pred_check_branch
        %558 = sbr.rel (%p556) target = $region68
      $region67: #{tpu_custom_call.1} parent=5 // pred_region
        %s559 = ssub.s32 %s20, 2
        // Predicated region
        $region69: #{tpu_custom_call.1} parent=67 // pred_check
          %p560 = pneg %p174
        $region70: #{tpu_custom_call.1} parent=67 // pred_check_branch
          %562 = sbr.rel (%p560) target = $region72
        $region71: #{tpu_custom_call.1} parent=67 // pred_region
          %p563 = scmp.lt.s32.totalorder %s26, 1
          %s564 = scalar_select %p563, %s26, 1
          %s565 = smul.addr %s564, 4
          %s566 = scalar_lea.vmem %s5, %s565
        $region72: #{tpu_custom_call.1} parent=67 // pred_fallthru
          _
      $region68: #{tpu_custom_call.1} parent=5 // pred_fallthru
        _
    $region6: #{tpu_custom_call.1} parent=1 // loop_footer
      %s24 = sadd.s32 1, %s20
    $region7: #{tpu_custom_call.1} parent=1 // loop_footer_branch
      %19 = sbr.rel target = $region3
    $region8: #{tpu_custom_call.1} parent=1 // loop_exit
      _
    %567 = vsyncpa [#allocation3], 1
    %s568 = scalar_lea.sflag [#allocation3], 1
    %569 = vsyncpa %s568, 1
    %570 = vsyncpa [#allocation5], 1
    %s571 = scalar_lea.sflag [#allocation5], 1
    %572 = vsyncpa %s571, 1
    %573 = vsyncpa [#allocation8], 1
    %s574 = scalar_lea.sflag [#allocation8], 1
    %575 = vsyncpa %s574, 1

</llo_original>
